<compile_context>
chip_gen: v6e
topology: v6e:2x2x1
jax: 0.10.0
libtpu: 0.0.40
codegen_flags: <defaults>
</compile_context>

<pallas_src>
import functools

import jax
import jax.numpy as jnp
from jax.experimental import pallas as pl
from jax.experimental.pallas import tpu as pltpu


def _round_up(v, m):
    return -(-v // m) * m


def _shift_zero(a, d, axis):
    """result[i] = a[i - d] along `axis`, zero-filled at the edges (static d)."""
    n = a.shape[axis]
    if d == 0:
        return a
    if d > 0:
        pad_shape = list(a.shape)
        pad_shape[axis] = d
        sl = jax.lax.slice_in_dim(a, 0, n - d, axis=axis)
        return jnp.concatenate([jnp.zeros(pad_shape, a.dtype), sl], axis=axis)
    dd = -d
    pad_shape = list(a.shape)
    pad_shape[axis] = dd
    sl = jax.lax.slice_in_dim(a, dd, n, axis=axis)
    return jnp.concatenate([sl, jnp.zeros(pad_shape, a.dtype)], axis=axis)


def _guided_filter_kernel(inv_n_ref, x_ref, y_ref, o_ref, *, r, eps):
    # x_ref / y_ref / o_ref blocks: (1, HP, LW)  (planes packed along lanes,
    # each plane surrounded by an r-wide zero halo in the lane direction).
    # inv_n_ref block: (HP, LW), resident (constant index_map); exactly zero at
    # every halo / padding position.
    x = x_ref[0]
    y = y_ref[0]
    inv_n = inv_n_ref[...]

    def box(a):
        # Exact zero-padded (2r+1)^2 box SUM of every packed plane inside `a`
        # (a may hold several fields concatenated along lanes).
        # H (sublane) direction: zero-filled shift-and-add.
        bh = a
        for d in range(1, r + 1):
            bh = bh + _shift_zero(a, d, 0) + _shift_zero(a, -d, 0)
        # W (lane) direction: XLU rolls.  The r-wide zero halo around every
        # packed plane means the rolled-in values at data lanes are exactly the
        # zero padding, so no boundary masks are needed; summing the d / (L-d)
        # pair makes the result independent of roll's rotation direction.
        out = bh
        ltot = a.shape[1]
        for d in range(1, r + 1):
            out = out + pltpu.roll(bh, d, 1) + pltpu.roll(bh, ltot - d, 1)
        return out

    lw = x.shape[1]

    # --- pass 1: one batched box over [x, y, x*y, x*x] packed along lanes ----
    b1 = box(jnp.concatenate([x, y, x * y, x * x], axis=1))
    mean_x = b1[:, 0 * lw:1 * lw] * inv_n
    mean_y = b1[:, 1 * lw:2 * lw] * inv_n
    cov_xy = b1[:, 2 * lw:3 * lw] * inv_n - mean_x * mean_y
    var_x = b1[:, 3 * lw:4 * lw] * inv_n - mean_x * mean_x

    a_coef = cov_xy / (var_x + eps)           # exact divide (matches reference)
    b_coef = mean_y - a_coef * mean_x

    # --- pass 2: one batched box over [a_coef, b_coef] ------------------------
    # a_coef == b_coef == 0 wherever inv_n == 0 (halo / pad positions), so the
    # zero-halo argument above still holds for this pass.
    b2 = box(jnp.concatenate([a_coef, b_coef], axis=1))
    mean_a = b2[:, :lw] * inv_n
    mean_b = b2[:, lw:] * inv_n

    o_ref[0] = mean_a * x + mean_b


def guided_filter(x, y, *, r, eps=1e-8):
    """Pallas guided filter. x, y: (N, C, H, W) arrays (NCHW)."""
    n_x, c_x, h_x, w_x = x.shape
    n_y, c_y, h, w = y.shape
    assert n_x == n_y, "Batch sizes must match"
    assert c_x == 1 or c_x == c_y, "Invalid channel dimensions"
    assert h_x == h and w_x == w, "Dimensions must match"
    assert h > 2 * r + 1 and w > 2 * r + 1, "Image size too small for radius"

    out_dtype = jnp.result_type(x.dtype, y.dtype)

    if c_x == 1 and c_y != 1:
        # TODO(synk): avoid materializing this broadcast in HBM by indexing the
        # shared guidance plane from the x BlockSpec index_map instead.
        x = jnp.broadcast_to(x, y.shape)

    p = n_y * c_y
    xf = x.reshape(p, h, w).astype(jnp.float32)
    yf = y.reshape(p, h, w).astype(jnp.float32)

    # --- blocking parameters --------------------------------------------------
    wp = w + 2 * r                  # per-plane lane width incl. r-wide zero halo
    hp = _round_up(h, 8)            # sublane-aligned rows (extra rows are zero)
    plane_bytes = hp * wp * 4
    target_block_bytes = 512 * 1024  # ~0.5 MiB per input block per grid step

    g = max(1, min(p, target_block_bytes // max(1, plane_bytes)))
    if p >= 2:
        g = min(g, -(-p // 2))       # guarantee >= 2 grid steps (v7x 2 TCs)
    num_blocks = -(-p // g)
    g = -(-p // num_blocks)          # even out plane padding across blocks
    p_pad = num_blocks * g
    lw_raw = g * wp
    lw = _round_up(lw_raw, 128)      # lane-dense, 128-aligned field slabs

    def pack(a):  # (P, H, W) -> (num_blocks, HP, LW) with zero halos/padding
        a = jnp.pad(a, ((0, p_pad - p), (0, hp - h), (r, r)))
        a = (a.reshape(num_blocks, g, hp, wp)
              .transpose(0, 2, 1, 3)
              .reshape(num_blocks, hp, lw_raw))
        if lw != lw_raw:
            a = jnp.pad(a, ((0, 0), (0, 0), (0, lw - lw_raw)))
        return a

    xp = pack(xf)
    yp = pack(yf)

    # --- host-side constant: 1 / window-area map (zero on halo / padding) ----
    ih = jnp.arange(h, dtype=jnp.int32)
    iw = jnp.arange(w, dtype=jnp.int32)
    cnt_h = (jnp.minimum(ih, r) + jnp.minimum(h - 1 - ih, r) + 1).astype(jnp.float32)
    cnt_w = (jnp.minimum(iw, r) + jnp.minimum(w - 1 - iw, r) + 1).astype(jnp.float32)
    inv_plane = 1.0 / (cnt_h[:, None] * cnt_w[None, :])          # (h, w)
    inv_plane = jnp.pad(inv_plane, ((0, hp - h), (r, r)))        # zeros at pads
    inv_n = jnp.tile(inv_plane, (1, g))                          # (hp, lw_raw)
    if lw != lw_raw:
        inv_n = jnp.pad(inv_n, ((0, 0), (0, lw - lw_raw)))

    # --- VMEM budget: generation-aware, with headroom -------------------------
    block_bytes = hp * lw * 4
    try:
        cap = int(getattr(pltpu.get_tpu_info(), "vmem_capacity_bytes", 0)) or (64 << 20)
    except Exception:  # pragma: no cover - conservative fallback
        cap = 64 << 20
    vmem_limit = int(min(int(0.85 * cap), max(32 << 20, 48 * block_bytes)))

    kernel = functools.partial(_guided_filter_kernel, r=r, eps=eps)
    out = pl.pallas_call(
        kernel,
        out_shape=jax.ShapeDtypeStruct((num_blocks, hp, lw), jnp.float32),
        grid=(num_blocks,),
        in_specs=[
            pl.BlockSpec((hp, lw), lambda i: (0, 0)),          # inv_n (resident)
            pl.BlockSpec((1, hp, lw), lambda i: (i, 0, 0)),    # x plane group
            pl.BlockSpec((1, hp, lw), lambda i: (i, 0, 0)),    # y plane group
        ],
        out_specs=pl.BlockSpec((1, hp, lw), lambda i: (i, 0, 0)),
        compiler_params=pltpu.CompilerParams(
            dimension_semantics=("parallel",),    # shards across v7x's 2 TCs
            vmem_limit_bytes=vmem_limit),
    )(inv_n, xp, yp)

    # unpack: (num_blocks, HP, LW) -> (P, H, W) -> (N, C, H, W)
    out = (out[:, :, :lw_raw]
           .reshape(num_blocks, hp, g, wp)
           .transpose(0, 2, 1, 3)
           .reshape(p_pad, hp, wp))
    out = out[:p, :h, r:r + w]
    return out.reshape(n_y, c_y, h, w).astype(out_dtype)


# ---------------- pure-JAX reference (mirrors the PyTorch forward) ----------


def _box_ref(a, r):
    k = 2 * r + 1
    return jax.lax.reduce_window(
        a, 0.0, jax.lax.add,
        window_dimensions=(1, 1, k, k),
        window_strides=(1, 1, 1, 1),
        padding=((0, 0), (0, 0), (r, r), (r, r)),
    )


def guided_filter_ref(x, y, *, r, eps=1e-8):
    n, c, h, w = y.shape
    if x.shape[1] == 1 and c != 1:
        x = jnp.broadcast_to(x, y.shape)
    ones = jnp.ones((1, 1, h, w), jnp.float32)
    big_n = _box_ref(ones, r)
    mean_x = _box_ref(x, r) / big_n
    mean_y = _box_ref(y, r) / big_n
    cov_xy = _box_ref(x * y, r) / big_n - mean_x * mean_y
    var_x = _box_ref(x * x, r) / big_n - mean_x * mean_x
    a_coef = cov_xy / (var_x + eps)
    b_coef = mean_y - a_coef * mean_x
    mean_a = _box_ref(a_coef, r) / big_n
    mean_b = _box_ref(b_coef, r) / big_n
    return mean_a * x + mean_b


if __name__ == "__main__":
    # GuidedFilter(r=2, eps=1e-8); deterministic inputs, small shapes.
    R = 2
    EPS = 1e-8
    N, C, H, W = 2, 4, 16, 16

    key = jax.random.PRNGKey(0)
    kx, ky = jax.random.split(key)
    x = jax.random.normal(kx, (N, C, H, W), dtype=jnp.float32)   # guidance
    y = jax.random.normal(ky, (N, C, H, W), dtype=jnp.float32)   # input

    out = jax.block_until_ready(guided_filter(x, y, r=R, eps=EPS))

    ref = guided_filter_ref(x, y, r=R, eps=EPS)
    assert out.shape == (N, C, H, W)
    assert jnp.allclose(out, ref, rtol=1e-3, atol=1e-3), (
        float(jnp.max(jnp.abs(out - ref))))

    print("KERNEL_OK")
</pallas_src>

<mosaic_0001>
module attributes {stable_mosaic.version = 11 : i64} {
  func.func @_guided_filter_kernel(%arg0: i32, %arg1: memref<16x128xf32, #tpu.memory_space<vmem>>, %arg2: memref<1x16x128xf32, #tpu.memory_space<vmem>>, %arg3: memref<1x16x128xf32, #tpu.memory_space<vmem>>, %arg4: memref<1x16x128xf32, #tpu.memory_space<vmem>>) attributes {dimension_semantics = [#tpu.dimension_semantics<parallel>], iteration_bounds = array<i64: 2>, scalar_prefetch = 0 : i64, scratch_operands = 0 : i64, tpu.core_type = #tpu.core_type<tc>, window_params = [{pipeline_mode = #tpu.pipeline_mode<synchronous>, transform_indices = @transform_0, window_bounds = array<i64: 16, 128>}, {transform_indices = @transform_1, window_bounds = array<i64: 1, 16, 128>}, {transform_indices = @transform_2, window_bounds = array<i64: 1, 16, 128>}, {transform_indices = @transform_3, window_bounds = array<i64: 1, 16, 128>}]} {
    %c0 = arith.constant 0 : index
    %c0_0 = arith.constant 0 : index
    %c0_1 = arith.constant 0 : index
    %0 = vector.load %arg2[%c0, %c0_0, %c0_1] : memref<1x16x128xf32, #tpu.memory_space<vmem>>, vector<1x16x128xf32>
    %1 = vector.shape_cast %0 : vector<1x16x128xf32> to vector<16x128xf32>
    %c0_2 = arith.constant 0 : index
    %c0_3 = arith.constant 0 : index
    %c0_4 = arith.constant 0 : index
    %2 = vector.load %arg3[%c0_2, %c0_3, %c0_4] : memref<1x16x128xf32, #tpu.memory_space<vmem>>, vector<1x16x128xf32>
    %3 = vector.shape_cast %2 : vector<1x16x128xf32> to vector<16x128xf32>
    %c0_5 = arith.constant 0 : index
    %c0_6 = arith.constant 0 : index
    %4 = vector.load %arg1[%c0_5, %c0_6] : memref<16x128xf32, #tpu.memory_space<vmem>>, vector<16x128xf32>
    %5 = arith.mulf %1, %3 : vector<16x128xf32>
    %6 = arith.mulf %1, %1 : vector<16x128xf32>
    %7 = tpu.concatenate %1, %3, %5, %6 in 1 : vector<16x128xf32>, vector<16x128xf32>, vector<16x128xf32>, vector<16x128xf32> -> vector<16x512xf32>
    %8 = vector.extract_strided_slice %7 {offsets = [0, 0], sizes = [15, 512], strides = [1, 1]} : vector<16x512xf32> to vector<15x512xf32>
    %cst = arith.constant 0.000000e+00 : f32
    %9 = vector.broadcast %cst : f32 to vector<1x512xf32>
    %10 = tpu.concatenate %9, %8 in 0 : vector<1x512xf32>, vector<15x512xf32> -> vector<16x512xf32>
    %11 = arith.addf %7, %10 : vector<16x512xf32>
    %12 = vector.extract_strided_slice %7 {offsets = [1, 0], sizes = [15, 512], strides = [1, 1]} : vector<16x512xf32> to vector<15x512xf32>
    %cst_7 = arith.constant 0.000000e+00 : f32
    %13 = vector.broadcast %cst_7 : f32 to vector<1x512xf32>
    %14 = tpu.concatenate %12, %13 in 0 : vector<15x512xf32>, vector<1x512xf32> -> vector<16x512xf32>
    %15 = arith.addf %11, %14 : vector<16x512xf32>
    %16 = vector.extract_strided_slice %7 {offsets = [0, 0], sizes = [14, 512], strides = [1, 1]} : vector<16x512xf32> to vector<14x512xf32>
    %cst_8 = arith.constant 0.000000e+00 : f32
    %17 = vector.broadcast %cst_8 : f32 to vector<2x512xf32>
    %18 = tpu.concatenate %17, %16 in 0 : vector<2x512xf32>, vector<14x512xf32> -> vector<16x512xf32>
    %19 = arith.addf %15, %18 : vector<16x512xf32>
    %20 = vector.extract_strided_slice %7 {offsets = [2, 0], sizes = [14, 512], strides = [1, 1]} : vector<16x512xf32> to vector<14x512xf32>
    %cst_9 = arith.constant 0.000000e+00 : f32
    %21 = vector.broadcast %cst_9 : f32 to vector<2x512xf32>
    %22 = tpu.concatenate %20, %21 in 0 : vector<14x512xf32>, vector<2x512xf32> -> vector<16x512xf32>
    %23 = arith.addf %19, %22 : vector<16x512xf32>
    %c1_i32 = arith.constant 1 : i32
    %24 = tpu.dynamic_rotate %23 by %c1_i32 dim 1 : vector<16x512xf32>, i32 -> vector<16x512xf32>
    %25 = arith.addf %23, %24 : vector<16x512xf32>
    %c511_i32 = arith.constant 511 : i32
    %26 = tpu.dynamic_rotate %23 by %c511_i32 dim 1 : vector<16x512xf32>, i32 -> vector<16x512xf32>
    %27 = arith.addf %25, %26 : vector<16x512xf32>
    %c2_i32 = arith.constant 2 : i32
    %28 = tpu.dynamic_rotate %23 by %c2_i32 dim 1 : vector<16x512xf32>, i32 -> vector<16x512xf32>
    %29 = arith.addf %27, %28 : vector<16x512xf32>
    %c510_i32 = arith.constant 510 : i32
    %30 = tpu.dynamic_rotate %23 by %c510_i32 dim 1 : vector<16x512xf32>, i32 -> vector<16x512xf32>
    %31 = arith.addf %29, %30 : vector<16x512xf32>
    %32 = vector.extract_strided_slice %31 {offsets = [0, 0], sizes = [16, 128], strides = [1, 1]} : vector<16x512xf32> to vector<16x128xf32>
    %33 = arith.mulf %32, %4 : vector<16x128xf32>
    %34 = vector.extract_strided_slice %31 {offsets = [0, 128], sizes = [16, 128], strides = [1, 1]} : vector<16x512xf32> to vector<16x128xf32>
    %35 = arith.mulf %34, %4 : vector<16x128xf32>
    %36 = vector.extract_strided_slice %31 {offsets = [0, 256], sizes = [16, 128], strides = [1, 1]} : vector<16x512xf32> to vector<16x128xf32>
    %37 = arith.mulf %36, %4 : vector<16x128xf32>
    %38 = arith.mulf %33, %35 : vector<16x128xf32>
    %39 = arith.subf %37, %38 : vector<16x128xf32>
    %40 = vector.extract_strided_slice %31 {offsets = [0, 384], sizes = [16, 128], strides = [1, 1]} : vector<16x512xf32> to vector<16x128xf32>
    %41 = arith.mulf %40, %4 : vector<16x128xf32>
    %42 = arith.mulf %33, %33 : vector<16x128xf32>
    %43 = arith.subf %41, %42 : vector<16x128xf32>
    %cst_10 = arith.constant 9.99999993E-9 : f32
    %44 = vector.broadcast %cst_10 : f32 to vector<16x128xf32>
    %45 = arith.addf %43, %44 : vector<16x128xf32>
    %46 = arith.divf %39, %45 : vector<16x128xf32>
    %47 = arith.mulf %46, %33 : vector<16x128xf32>
    %48 = arith.subf %35, %47 : vector<16x128xf32>
    %49 = tpu.concatenate %46, %48 in 1 : vector<16x128xf32>, vector<16x128xf32> -> vector<16x256xf32>
    %50 = vector.extract_strided_slice %49 {offsets = [0, 0], sizes = [15, 256], strides = [1, 1]} : vector<16x256xf32> to vector<15x256xf32>
    %cst_11 = arith.constant 0.000000e+00 : f32
    %51 = vector.broadcast %cst_11 : f32 to vector<1x256xf32>
    %52 = tpu.concatenate %51, %50 in 0 : vector<1x256xf32>, vector<15x256xf32> -> vector<16x256xf32>
    %53 = arith.addf %49, %52 : vector<16x256xf32>
    %54 = vector.extract_strided_slice %49 {offsets = [1, 0], sizes = [15, 256], strides = [1, 1]} : vector<16x256xf32> to vector<15x256xf32>
    %cst_12 = arith.constant 0.000000e+00 : f32
    %55 = vector.broadcast %cst_12 : f32 to vector<1x256xf32>
    %56 = tpu.concatenate %54, %55 in 0 : vector<15x256xf32>, vector<1x256xf32> -> vector<16x256xf32>
    %57 = arith.addf %53, %56 : vector<16x256xf32>
    %58 = vector.extract_strided_slice %49 {offsets = [0, 0], sizes = [14, 256], strides = [1, 1]} : vector<16x256xf32> to vector<14x256xf32>
    %cst_13 = arith.constant 0.000000e+00 : f32
    %59 = vector.broadcast %cst_13 : f32 to vector<2x256xf32>
    %60 = tpu.concatenate %59, %58 in 0 : vector<2x256xf32>, vector<14x256xf32> -> vector<16x256xf32>
    %61 = arith.addf %57, %60 : vector<16x256xf32>
    %62 = vector.extract_strided_slice %49 {offsets = [2, 0], sizes = [14, 256], strides = [1, 1]} : vector<16x256xf32> to vector<14x256xf32>
    %cst_14 = arith.constant 0.000000e+00 : f32
    %63 = vector.broadcast %cst_14 : f32 to vector<2x256xf32>
    %64 = tpu.concatenate %62, %63 in 0 : vector<14x256xf32>, vector<2x256xf32> -> vector<16x256xf32>
    %65 = arith.addf %61, %64 : vector<16x256xf32>
    %c1_i32_15 = arith.constant 1 : i32
    %66 = tpu.dynamic_rotate %65 by %c1_i32_15 dim 1 : vector<16x256xf32>, i32 -> vector<16x256xf32>
    %67 = arith.addf %65, %66 : vector<16x256xf32>
    %c255_i32 = arith.constant 255 : i32
    %68 = tpu.dynamic_rotate %65 by %c255_i32 dim 1 : vector<16x256xf32>, i32 -> vector<16x256xf32>
    %69 = arith.addf %67, %68 : vector<16x256xf32>
    %c2_i32_16 = arith.constant 2 : i32
    %70 = tpu.dynamic_rotate %65 by %c2_i32_16 dim 1 : vector<16x256xf32>, i32 -> vector<16x256xf32>
    %71 = arith.addf %69, %70 : vector<16x256xf32>
    %c254_i32 = arith.constant 254 : i32
    %72 = tpu.dynamic_rotate %65 by %c254_i32 dim 1 : vector<16x256xf32>, i32 -> vector<16x256xf32>
    %73 = arith.addf %71, %72 : vector<16x256xf32>
    %74 = vector.extract_strided_slice %73 {offsets = [0, 0], sizes = [16, 128], strides = [1, 1]} : vector<16x256xf32> to vector<16x128xf32>
    %75 = arith.mulf %74, %4 : vector<16x128xf32>
    %76 = vector.extract_strided_slice %73 {offsets = [0, 128], sizes = [16, 128], strides = [1, 1]} : vector<16x256xf32> to vector<16x128xf32>
    %77 = arith.mulf %76, %4 : vector<16x128xf32>
    %78 = arith.mulf %75, %1 : vector<16x128xf32>
    %79 = arith.addf %78, %77 : vector<16x128xf32>
    %c0_17 = arith.constant 0 : index
    %c0_18 = arith.constant 0 : index
    %c0_19 = arith.constant 0 : index
    %80 = vector.load %arg4[%c0_17, %c0_18, %c0_19] : memref<1x16x128xf32, #tpu.memory_space<vmem>>, vector<1x16x128xf32>
    %81 = vector.shape_cast %80 : vector<1x16x128xf32> to vector<16x128xf32>
    %82 = vector.shape_cast %79 : vector<16x128xf32> to vector<1x16x128xf32>
    tpu.vector_store %arg4[%c0_17, %c0_18, %c0_19], %82 {strides = array<i32>} : memref<1x16x128xf32, #tpu.memory_space<vmem>>, vector<1x16x128xf32>,
    return
  }
  func.func @transform_0(%arg0: i32) -> (i32, i32) {
    %c0_i32 = arith.constant 0 : i32
    %c0_i32_0 = arith.constant 0 : i32
    %c0_i32_1 = arith.constant 0 : i32
    return %c0_i32, %c0_i32_0 : i32, i32
  }
  func.func @transform_1(%arg0: i32) -> (i32, i32, i32) {
    %c0_i32 = arith.constant 0 : i32
    %c0_i32_0 = arith.constant 0 : i32
    %c0_i32_1 = arith.constant 0 : i32
    return %arg0, %c0_i32, %c0_i32_0 : i32, i32, i32
  }
  func.func @transform_2(%arg0: i32) -> (i32, i32, i32) {
    %c0_i32 = arith.constant 0 : i32
    %c0_i32_0 = arith.constant 0 : i32
    %c0_i32_1 = arith.constant 0 : i32
    return %arg0, %c0_i32, %c0_i32_0 : i32, i32, i32
  }
  func.func @transform_3(%arg0: i32) -> (i32, i32, i32) {
    %c0_i32 = arith.constant 0 : i32
    %c0_i32_0 = arith.constant 0 : i32
    %c0_i32_1 = arith.constant 0 : i32
    return %arg0, %c0_i32, %c0_i32_0 : i32, i32, i32
  }
}

</mosaic_0001>

<llo_original>
// kernel: tpu_custom_call.1
$region0: #{tpu_custom_call.1}
  #allocation0 [shape = 'u32[]', space=smem, size = 0x4, offset = 0x4, fixed_abs, tag = 'smem constant byte address 0x4 - core index']
  #allocation1 [shape = 'u32[144,128]{1,0:T(1,128)}', space=vmem, size = 0x12000, scoped, tag = 'internal scratch']
  %s0 = inlined_call_operand.hbm [shape: f32[16,128], index: 0, kind: input, shape index: {}]
  %s1 = inlined_call_operand.hbm [shape: f32[2,16,128], index: 1, kind: input, shape index: {}]
  %s2 = inlined_call_operand.hbm [shape: f32[2,16,128], index: 2, kind: input, shape index: {}]
  %s3 = inlined_call_operand.hbm [shape: f32[2,16,128], index: 3, kind: output, shape index: {}]
  %s4 = sld [smem:[#allocation0]]
  $region57: #{tpu_custom_call.1} parent=0
    _
  %s6 = ssub.s32 1, %s4
  %s7 = scalar_select 0, %s6, %s4
  $region1: #{tpu_custom_call.1} parent=0
    #allocation2 [shape = 'u8[8192]{0}', space=vmem, size = 0x2000, scoped, tag = 'input window, operand 0, single buffered']
    #allocation3 [shape = 's32[2]{0}', space=sflag, size = 0x8, scoped, tag = 'scoped memory for tpu_custom_call.1']
    #allocation4 [shape = 's32[2]{0}', space=sflag, size = 0x8, scoped, tag = 'scoped memory for tpu_custom_call.1']
    #allocation5 [shape = 'u8[16384]{0}', space=vmem, size = 0x4000, scoped, tag = 'input window, operand 1']
    #allocation6 [shape = 's32[2]{0}', space=sflag, size = 0x8, scoped, tag = 'scoped memory for tpu_custom_call.1']
    #allocation7 [shape = 'u8[16384]{0}', space=vmem, size = 0x4000, scoped, tag = 'input window, operand 2']
    #allocation8 [shape = 'u8[16384]{0}', space=vmem, size = 0x4000, scoped, tag = 'output window, operand 0']
    %8 = vsyncpa [#allocation3], 0
    %9 = vsyncpa [#allocation6], 0
    %s10 = scalar_lea.sflag [#allocation6], 1
    %11 = vsyncpa %s10, 0
    %12 = vsyncpa [#allocation4], 0
    %s13 = scalar_lea.sflag [#allocation4], 1
    %14 = vsyncpa %s13, 0
    loop: start=0, step=1, limit=4
    $region2: #{tpu_custom_call.1} parent=1 // loop_pre_header
      _
    $region3: #{tpu_custom_call.1} parent=1 // loop_header
      %s16 = sphi 0, %s20
      %p17 = scmp.ge.s32.totalorder %s16, 4
      %s24 = sphi 0, %s24
      %s26 = sphi 0, %s24
      %s27 = sphi 0, %s26
      %s41 = sphi 0, %s27
      %s47 = sphi 0, %s49
      %s50 = sphi 0, %s47
      %s51 = sphi 0, %s50
      %s67 = sphi 0, %s51
      %s73 = sphi 0, %s75
      %s76 = sphi 0, %s73
      %s77 = sphi 0, %s76
      %s93 = sphi 0, %s77
      %s99 = sphi 0, %s101
      %s102 = sphi 0, %s99
      %s103 = sphi 0, %s102
      %s119 = sphi 0, %s103
    $region4: #{tpu_custom_call.1} parent=1 // loop_header_branch
      %19 = sbr.rel (%p17) target = $region8
    $region5: #{tpu_custom_call.1} parent=1 // loop_body
      %s21 = ssub.s32 %s16, 1
      %s22 = ssub.s32 %s16, 2
      %s23 = sadd.s32 %s16, 1
      %s25 = sadd.s32 %s24, 1
      %p28 = scmp.eq.s32.totalorder %s16, 1
      %p29 = scmp.ne.s32.totalorder %s24, %s26
      %p30 = scmp.eq.s32.totalorder %s16, 0
      %p31 = por %p29, %p30
      %p32 = scmp.ne.s32.totalorder %s24, %s26
      %p33 = scmp.eq.s32.totalorder %s21, 1
      %p34 = por %p32, %p33
      %p35 = scmp.ne.s32.totalorder %s26, %s27
      %p36 = scmp.eq.s32.totalorder %s21, 0
      %p37 = por %p35, %p36
      %p38 = scmp.ne.s32.totalorder %s26, %s27
      %p39 = scmp.eq.s32.totalorder %s22, 1
      %p40 = por %p38, %p39
      %p42 = scmp.ne.s32.totalorder %s27, %s41
      %p43 = scmp.eq.s32.totalorder %s22, 0
      %p44 = por %p42, %p43
      %s45 = ssub.s32 %s16, %s23
      %p46 = scmp.eq.s32.totalorder %s45, 0
      %s48 = sadd.s32 %s47, 1
      %s49 = scalar_select %p46, %s47, %s48
      %p52 = pneg %p46
      %p53 = scmp.eq.s32.totalorder %s16, 1
      %p54 = por %p52, %p53
      %p55 = scmp.ne.s32.totalorder %s47, %s50
      %p56 = scmp.eq.s32.totalorder %s16, 0
      %p57 = por %p55, %p56
      %p58 = scmp.ne.s32.totalorder %s47, %s50
      %p59 = scmp.eq.s32.totalorder %s21, 1
      %p60 = por %p58, %p59
      %p61 = scmp.ne.s32.totalorder %s50, %s51
      %p62 = scmp.eq.s32.totalorder %s21, 0
      %p63 = por %p61, %p62
      %p64 = scmp.ne.s32.totalorder %s50, %s51
      %p65 = scmp.eq.s32.totalorder %s22, 1
      %p66 = por %p64, %p65
      %p68 = scmp.ne.s32.totalorder %s51, %s67
      %p69 = scmp.eq.s32.totalorder %s22, 0
      %p70 = por %p68, %p69
      %s71 = ssub.s32 %s16, %s23
      %p72 = scmp.eq.s32.totalorder %s71, 0
      %s74 = sadd.s32 %s73, 1
      %s75 = scalar_select %p72, %s73, %s74
      %p78 = pneg %p72
      %p79 = scmp.eq.s32.totalorder %s16, 1
      %p80 = por %p78, %p79
      %p81 = scmp.ne.s32.totalorder %s73, %s76
      %p82 = scmp.eq.s32.totalorder %s16, 0
      %p83 = por %p81, %p82
      %p84 = scmp.ne.s32.totalorder %s73, %s76
      %p85 = scmp.eq.s32.totalorder %s21, 1
      %p86 = por %p84, %p85
      %p87 = scmp.ne.s32.totalorder %s76, %s77
      %p88 = scmp.eq.s32.totalorder %s21, 0
      %p89 = por %p87, %p88
      %p90 = scmp.ne.s32.totalorder %s76, %s77
      %p91 = scmp.eq.s32.totalorder %s22, 1
      %p92 = por %p90, %p91
      %p94 = scmp.ne.s32.totalorder %s77, %s93
      %p95 = scmp.eq.s32.totalorder %s22, 0
      %p96 = por %p94, %p95
      %s97 = ssub.s32 %s16, %s23
      %p98 = scmp.eq.s32.totalorder %s97, 0
      %s100 = sadd.s32 %s99, 1
      %s101 = scalar_select %p98, %s99, %s100
      %p104 = pneg %p98
      %p105 = scmp.eq.s32.totalorder %s16, 1
      %p106 = por %p104, %p105
      %p107 = scmp.ne.s32.totalorder %s99, %s102
      %p108 = scmp.eq.s32.totalorder %s16, 0
      %p109 = por %p107, %p108
      %p110 = scmp.ne.s32.totalorder %s99, %s102
      %p111 = scmp.eq.s32.totalorder %s21, 1
      %p112 = por %p110, %p111
      %p113 = scmp.ne.s32.totalorder %s102, %s103
      %p114 = scmp.eq.s32.totalorder %s21, 0
      %p115 = por %p113, %p114
      %p116 = scmp.ne.s32.totalorder %s102, %s103
      %p117 = scmp.eq.s32.totalorder %s22, 1
      %p118 = por %p116, %p117
      %p120 = scmp.ne.s32.totalorder %s103, %s119
      %p121 = scmp.eq.s32.totalorder %s22, 0
      %p122 = por %p120, %p121
      %p123 = scmp.le.s32.totalorder 1, %s16
      %p124 = scmp.lt.s32.totalorder %s16, 3
      %p125 = pnand %p123, %p124
      %p126 = pneg %p125
      // Predicated region
      $region9: #{tpu_custom_call.1} parent=5 // pred_check
        _
      $region10: #{tpu_custom_call.1} parent=5 // pred_check_branch
        %128 = sbr.rel (%p125) target = $region12
      $region11: #{tpu_custom_call.1} parent=5 // pred_region
        %s129 = ssub.s32 %s16, 1
        // Predicated region
        $region13: #{tpu_custom_call.1} parent=11 // pred_check
          %p130 = pneg %p37
        $region14: #{tpu_custom_call.1} parent=11 // pred_check_branch
          %132 = sbr.rel (%p130) target = $region16
        $region15: #{tpu_custom_call.1} parent=11 // pred_region
          %s134 = ssub.s32 256, 256
          %135 = vsyncadd [#allocation3], %s134
          %s136 = sshll.u32 [#allocation2], 4
          %s137 = int_to_ptr.vmem [resolvable:$true] %s136
          %142 = dma.hbm_to_vmem [thread:$0]  %s0, 256, %s137, [#allocation3], 128, 128, 8
        $region16: #{tpu_custom_call.1} parent=11 // pred_fallthru
          _
      $region12: #{tpu_custom_call.1} parent=5 // pred_fallthru
        _
      %p143 = scmp.lt.s32.totalorder %s16, 2
      // Predicated region
      $region17: #{tpu_custom_call.1} parent=5 // pred_check
        %p144 = pneg %p143
      $region18: #{tpu_custom_call.1} parent=5 // pred_check_branch
        %146 = sbr.rel (%p144) target = $region20
      $region19: #{tpu_custom_call.1} parent=5 // pred_region
        // Predicated region
        $region21: #{tpu_custom_call.1} parent=19 // pred_check
          %p147 = pneg %p57
        $region22: #{tpu_custom_call.1} parent=19 // pred_check_branch
          %149 = sbr.rel (%p147) target = $region24
        $region23: #{tpu_custom_call.1} parent=19 // pred_region
          %s150 = sand.u32 %s16, 1
          %s151 = scalar_lea.sflag [#allocation6], %s150
          %s152 = sand.u32 %s47, 1
          %s153 = smul.addr %s152, 16
          %s154 = scalar_lea.vmem [#allocation5], %s153
          %s156 = ssub.s32 256, 256
          %157 = vsyncadd %s151, %s156
          %s158 = smul.addr %s16, 2
          %s159 = smul.addr %s158, 128
          %s160 = scalar_lea.hbm %s1, %s159
          %s161 = sshll.u32 %s154, 4
          %s162 = int_to_ptr.vmem [resolvable:$true] %s161
          %167 = dma.hbm_to_vmem [thread:$0]  %s160, 256, %s162, %s151, 128, 128, 8
        $region24: #{tpu_custom_call.1} parent=19 // pred_fallthru
          _
        // Predicated region
        $region25: #{tpu_custom_call.1} parent=19 // pred_check
          %p168 = pneg %p83
        $region26: #{tpu_custom_call.1} parent=19 // pred_check_branch
          %170 = sbr.rel (%p168) target = $region28
        $region27: #{tpu_custom_call.1} parent=19 // pred_region
          %s171 = sand.u32 %s16, 1
          %s172 = scalar_lea.sflag [#allocation6], %s171
          %s173 = sand.u32 %s73, 1
          %s174 = smul.addr %s173, 16
          %s175 = scalar_lea.vmem [#allocation7], %s174
          %s177 = ssub.s32 256, 256
          %178 = vsyncadd %s172, %s177
          %s179 = smul.addr %s16, 2
          %s180 = smul.addr %s179, 128
          %s181 = scalar_lea.hbm %s2, %s180
          %s182 = sshll.u32 %s175, 4
          %s183 = int_to_ptr.vmem [resolvable:$true] %s182
          %188 = dma.hbm_to_vmem [thread:$0]  %s181, 256, %s183, %s172, 128, 128, 8
        $region28: #{tpu_custom_call.1} parent=19 // pred_fallthru
          _
      $region20: #{tpu_custom_call.1} parent=5 // pred_fallthru
        _
      %p189 = scmp.le.s32.totalorder 1, %s16
      %p190 = scmp.lt.s32.totalorder %s16, 3
      %p191 = pnand %p189, %p190
      %p192 = pneg %p191
      // Predicated region
      $region29: #{tpu_custom_call.1} parent=5 // pred_check
        _
      $region30: #{tpu_custom_call.1} parent=5 // pred_check_branch
        %194 = sbr.rel (%p191) target = $region32
      $region31: #{tpu_custom_call.1} parent=5 // pred_region
        %s195 = ssub.s32 %s16, 1
        // Predicated region
        $region33: #{tpu_custom_call.1} parent=31 // pred_check
          %p196 = pneg %p37
        $region34: #{tpu_custom_call.1} parent=31 // pred_check_branch
          %198 = sbr.rel (%p196) target = $region36
        $region35: #{tpu_custom_call.1} parent=31 // pred_region
          %199 = dma.done [#allocation3], 256
        $region36: #{tpu_custom_call.1} parent=31 // pred_fallthru
          _
        %s200 = sand.u32 %s21, 1
        %s201 = scalar_lea.sflag [#allocation6], %s200
        %s202 = sand.u32 %s50, 1
        %s203 = smul.addr %s202, 16
        %s204 = scalar_lea.vmem [#allocation5], %s203
        // Predicated region
        $region37: #{tpu_custom_call.1} parent=31 // pred_check
          %p205 = pneg %p63
        $region38: #{tpu_custom_call.1} parent=31 // pred_check_branch
          %207 = sbr.rel (%p205) target = $region40
        $region39: #{tpu_custom_call.1} parent=31 // pred_region
          %208 = dma.done %s201, 256
        $region40: #{tpu_custom_call.1} parent=31 // pred_fallthru
          _
        %s209 = sand.u32 %s21, 1
        %s210 = scalar_lea.sflag [#allocation6], %s209
        %s211 = sand.u32 %s76, 1
        %s212 = smul.addr %s211, 16
        %s213 = scalar_lea.vmem [#allocation7], %s212
        // Predicated region
        $region41: #{tpu_custom_call.1} parent=31 // pred_check
          %p214 = pneg %p89
        $region42: #{tpu_custom_call.1} parent=31 // pred_check_branch
          %216 = sbr.rel (%p214) target = $region44
        $region43: #{tpu_custom_call.1} parent=31 // pred_region
          %217 = dma.done %s210, 256
        $region44: #{tpu_custom_call.1} parent=31 // pred_fallthru
          _
        %p218 = pneg %p37
        %p219 = pneg %p34
        %s220 = sand.u32 %s21, 1
        %s221 = scalar_lea.sflag [#allocation6], %s220
        %s222 = sand.u32 %s50, 1
        %s223 = smul.addr %s222, 16
        %s224 = scalar_lea.vmem [#allocation5], %s223
        %p225 = pneg %p63
        %p226 = pneg %p60
        %s227 = sand.u32 %s21, 1
        %s228 = scalar_lea.sflag [#allocation6], %s227
        %s229 = sand.u32 %s76, 1
        %s230 = smul.addr %s229, 16
        %s231 = scalar_lea.vmem [#allocation7], %s230
        %p232 = pneg %p89
        %p233 = pneg %p86
        %p234 = pneg %p115
        %p235 = pneg %p112
        %s236 = sand.u32 %s102, 1
        %s237 = scalar_lea.sflag [#allocation4], %s236
        %s238 = sand.u32 %s102, 1
        %s239 = smul.addr %s238, 16
        %s240 = scalar_lea.vmem [#allocation8], %s239
        %v241 = vld [vmem:[%s204] sm:$0xff]
        %v242 = vld [vmem:[%s204 + $0x8] sm:$0xff]
        %v243 = vld [vmem:[%s213] sm:$0xff]
        %v244 = vld [vmem:[%s213 + $0x8] sm:$0xff]
        %v245 = vld [vmem:[#allocation2] sm:$0xff]
        %v246 = vld [vmem:[#allocation2 + $0x8] sm:$0xff]
        %v247 = vmul.f32 %v241, %v243
        %v248 = vmul.f32 %v242, %v244
        %v249 = vmul.f32 %v241, %v241
        %v250 = vmul.f32 %v242, %v242
        %vm259 = vcmask 1040384
        %v260 = vrot.slane %v241, 7
        %v261 = vrot.slane %v243, 7
        %v262 = vrot.slane %v247, 7
        %v263 = vrot.slane %v249, 7
        %v264 = vrot.slane %v242, 7
        %v265 = vsel %vm259, %v260, %v264
        %v266 = vrot.slane %v244, 7
        %v267 = vsel %vm259, %v261, %v266
        %v268 = vrot.slane %v248, 7
        %v269 = vsel %vm259, %v262, %v268
        %v270 = vrot.slane %v250, 7
        %v271 = vsel %vm259, %v263, %v270
        %v280 = vsel %vm259, 0.0, %v260
        %v281 = vsel %vm259, 0.0, %v261
        %v282 = vsel %vm259, 0.0, %v262
        %v283 = vsel %vm259, 0.0, %v263
        %v284 = vadd.f32 %v241, %v280
        %v285 = vadd.f32 %v243, %v281
        %v286 = vadd.f32 %v247, %v282
        %v287 = vadd.f32 %v249, %v283
        %v288 = vadd.f32 %v242, %v265
        %v289 = vadd.f32 %v244, %v267
        %v290 = vadd.f32 %v248, %v269
        %v291 = vadd.f32 %v250, %v271
        %vm292 = vcmask 1046528
        %v293 = vrot.slane %v241, 1
        %v294 = vrot.slane %v242, 1
        %v295 = vsel %vm292, %v293, %v294
        %v296 = vrot.slane %v243, 1
        %v297 = vrot.slane %v244, 1
        %v298 = vsel %vm292, %v296, %v297
        %v299 = vrot.slane %v247, 1
        %v300 = vrot.slane %v248, 1
        %v301 = vsel %vm292, %v299, %v300
        %v302 = vrot.slane %v249, 1
        %v303 = vrot.slane %v250, 1
        %v304 = vsel %vm292, %v302, %v303
        %v313 = vsel %vm292, %v294, 0.0
        %v314 = vsel %vm292, %v297, 0.0
        %v315 = vsel %vm292, %v300, 0.0
        %v316 = vsel %vm292, %v303, 0.0
        %v317 = vadd.f32 %v284, %v295
        %v318 = vadd.f32 %v285, %v298
        %v319 = vadd.f32 %v286, %v301
        %v320 = vadd.f32 %v287, %v304
        %v321 = vadd.f32 %v288, %v313
        %v322 = vadd.f32 %v289, %v314
        %v323 = vadd.f32 %v290, %v315
        %v324 = vadd.f32 %v291, %v316
        %vm325 = vcmask 1041408
        %v326 = vrot.slane %v241, 6
        %v327 = vrot.slane %v243, 6
        %v328 = vrot.slane %v247, 6
        %v329 = vrot.slane %v249, 6
        %v330 = vrot.slane %v242, 6
        %v331 = vsel %vm325, %v326, %v330
        %v332 = vrot.slane %v244, 6
        %v333 = vsel %vm325, %v327, %v332
        %v334 = vrot.slane %v248, 6
        %v335 = vsel %vm325, %v328, %v334
        %v336 = vrot.slane %v250, 6
        %v337 = vsel %vm325, %v329, %v336
        %v346 = vsel %vm325, 0.0, %v326
        %v347 = vsel %vm325, 0.0, %v327
        %v348 = vsel %vm325, 0.0, %v328
        %v349 = vsel %vm325, 0.0, %v329
        %v350 = vadd.f32 %v317, %v346
        %v351 = vadd.f32 %v318, %v347
        %v352 = vadd.f32 %v319, %v348
        %v353 = vadd.f32 %v320, %v349
        %v354 = vadd.f32 %v321, %v331
        %v355 = vadd.f32 %v322, %v333
        %v356 = vadd.f32 %v323, %v335
        %v357 = vadd.f32 %v324, %v337
        %vm358 = vcmask 1045504
        %v359 = vrot.slane %v241, 2
        %v360 = vrot.slane %v242, 2
        %v361 = vsel %vm358, %v359, %v360
        %v362 = vrot.slane %v243, 2
        %v363 = vrot.slane %v244, 2
        %v364 = vsel %vm358, %v362, %v363
        %v365 = vrot.slane %v247, 2
        %v366 = vrot.slane %v248, 2
        %v367 = vsel %vm358, %v365, %v366
        %v368 = vrot.slane %v249, 2
        %v369 = vrot.slane %v250, 2
        %v370 = vsel %vm358, %v368, %v369
        %v379 = vsel %vm358, %v360, 0.0
        %v380 = vsel %vm358, %v363, 0.0
        %v381 = vsel %vm358, %v366, 0.0
        %v382 = vsel %vm358, %v369, 0.0
        %v383 = vadd.f32 %v350, %v361
        %v384 = vadd.f32 %v351, %v364
        %v385 = vadd.f32 %v352, %v367
        %v386 = vadd.f32 %v353, %v370
        %v387 = vadd.f32 %v354, %v379
        %v388 = vadd.f32 %v355, %v380
        %v389 = vadd.f32 %v356, %v381
        %v390 = vadd.f32 %v357, %v382
        %391 = vrot.lane.b32.xlu0 %v383, 1
        %v392 = vpop.permute.xlu0 %391
        %393 = vrot.lane.b32.xlu0 %v387, 1
        %v394 = vpop.permute.xlu0 %393
        %395 = vrot.lane.b32.xlu0 %v384, 1
        %v396 = vpop.permute.xlu0 %395
        %397 = vrot.lane.b32.xlu0 %v388, 1
        %v398 = vpop.permute.xlu0 %397
        %399 = vrot.lane.b32.xlu0 %v385, 1
        %v400 = vpop.permute.xlu0 %399
        %401 = vrot.lane.b32.xlu0 %v389, 1
        %v402 = vpop.permute.xlu0 %401
        %403 = vrot.lane.b32.xlu0 %v386, 1
        %v404 = vpop.permute.xlu0 %403
        %405 = vrot.lane.b32.xlu0 %v390, 1
        %v406 = vpop.permute.xlu0 %405
        %v407 = vlaneseq
        %v408 = vand.u32 %v407, 127
        %vm409 = vcmp.lt.s32.totalorder %v408, 1
        %v410 = vsel %vm409, %v400, %v404
        %v411 = vsel %vm409, %v402, %v406
        %v412 = vsel %vm409, %v396, %v400
        %v413 = vsel %vm409, %v398, %v402
        %v414 = vsel %vm409, %v392, %v396
        %v415 = vsel %vm409, %v394, %v398
        %v416 = vsel %vm409, %v404, %v392
        %v417 = vsel %vm409, %v406, %v394
        %v418 = vadd.f32 %v383, %v416
        %v419 = vadd.f32 %v384, %v414
        %v420 = vadd.f32 %v385, %v412
        %v421 = vadd.f32 %v386, %v410
        %v422 = vadd.f32 %v387, %v417
        %v423 = vadd.f32 %v388, %v415
        %v424 = vadd.f32 %v389, %v413
        %v425 = vadd.f32 %v390, %v411
        %426 = vrot.lane.b32.xlu0 %v383, 127
        %v427 = vpop.permute.xlu0 %426
        %428 = vrot.lane.b32.xlu0 %v387, 127
        %v429 = vpop.permute.xlu0 %428
        %430 = vrot.lane.b32.xlu0 %v384, 127
        %v431 = vpop.permute.xlu0 %430
        %432 = vrot.lane.b32.xlu0 %v388, 127
        %v433 = vpop.permute.xlu0 %432
        %434 = vrot.lane.b32.xlu0 %v385, 127
        %v435 = vpop.permute.xlu0 %434
        %436 = vrot.lane.b32.xlu0 %v389, 127
        %v437 = vpop.permute.xlu0 %436
        %438 = vrot.lane.b32.xlu0 %v386, 127
        %v439 = vpop.permute.xlu0 %438
        %440 = vrot.lane.b32.xlu0 %v390, 127
        %v441 = vpop.permute.xlu0 %440
        %vm442 = vcmp.lt.s32.totalorder %v408, 127
        %v443 = vsel %vm442, %v435, %v439
        %v444 = vsel %vm442, %v437, %v441
        %v445 = vsel %vm442, %v431, %v435
        %v446 = vsel %vm442, %v433, %v437
        %v447 = vsel %vm442, %v427, %v431
        %v448 = vsel %vm442, %v429, %v433
        %v449 = vsel %vm442, %v439, %v427
        %v450 = vsel %vm442, %v441, %v429
        %v451 = vadd.f32 %v418, %v447
        %v452 = vadd.f32 %v419, %v445
        %v453 = vadd.f32 %v420, %v443
        %v454 = vadd.f32 %v421, %v449
        %v455 = vadd.f32 %v422, %v448
        %v456 = vadd.f32 %v423, %v446
        %v457 = vadd.f32 %v424, %v444
        %v458 = vadd.f32 %v425, %v450
        %459 = vrot.lane.b32.xlu0 %v383, 2
        %v460 = vpop.permute.xlu0 %459
        %461 = vrot.lane.b32.xlu0 %v387, 2
        %v462 = vpop.permute.xlu0 %461
        %463 = vrot.lane.b32.xlu0 %v384, 2
        %v464 = vpop.permute.xlu0 %463
        %465 = vrot.lane.b32.xlu0 %v388, 2
        %v466 = vpop.permute.xlu0 %465
        %467 = vrot.lane.b32.xlu0 %v385, 2
        %v468 = vpop.permute.xlu0 %467
        %469 = vrot.lane.b32.xlu0 %v389, 2
        %v470 = vpop.permute.xlu0 %469
        %471 = vrot.lane.b32.xlu0 %v386, 2
        %v472 = vpop.permute.xlu0 %471
        %473 = vrot.lane.b32.xlu0 %v390, 2
        %v474 = vpop.permute.xlu0 %473
        %vm475 = vcmp.lt.s32.totalorder %v408, 2
        %v476 = vsel %vm475, %v468, %v472
        %v477 = vsel %vm475, %v470, %v474
        %v478 = vsel %vm475, %v464, %v468
        %v479 = vsel %vm475, %v466, %v470
        %v480 = vsel %vm475, %v460, %v464
        %v481 = vsel %vm475, %v462, %v466
        %v482 = vsel %vm475, %v472, %v460
        %v483 = vsel %vm475, %v474, %v462
        %v484 = vadd.f32 %v451, %v482
        %v485 = vadd.f32 %v452, %v480
        %v486 = vadd.f32 %v453, %v478
        %v487 = vadd.f32 %v454, %v476
        %v488 = vadd.f32 %v455, %v483
        %v489 = vadd.f32 %v456, %v481
        %v490 = vadd.f32 %v457, %v479
        %v491 = vadd.f32 %v458, %v477
        %492 = vrot.lane.b32.xlu0 %v383, 126
        %v493 = vpop.permute.xlu0 %492
        %494 = vrot.lane.b32.xlu0 %v387, 126
        %v495 = vpop.permute.xlu0 %494
        %496 = vrot.lane.b32.xlu0 %v384, 126
        %v497 = vpop.permute.xlu0 %496
        %498 = vrot.lane.b32.xlu0 %v388, 126
        %v499 = vpop.permute.xlu0 %498
        %500 = vrot.lane.b32.xlu0 %v385, 126
        %v501 = vpop.permute.xlu0 %500
        %502 = vrot.lane.b32.xlu0 %v389, 126
        %v503 = vpop.permute.xlu0 %502
        %504 = vrot.lane.b32.xlu0 %v386, 126
        %v505 = vpop.permute.xlu0 %504
        %506 = vrot.lane.b32.xlu0 %v390, 126
        %v507 = vpop.permute.xlu0 %506
        %vm508 = vcmp.lt.s32.totalorder %v408, 126
        %v509 = vsel %vm508, %v501, %v505
        %v510 = vsel %vm508, %v503, %v507
        %v511 = vsel %vm508, %v497, %v501
        %v512 = vsel %vm508, %v499, %v503
        %v513 = vsel %vm508, %v493, %v497
        %v514 = vsel %vm508, %v495, %v499
        %v515 = vsel %vm508, %v505, %v493
        %v516 = vsel %vm508, %v507, %v495
        %v517 = vadd.f32 %v484, %v513
        %v518 = vadd.f32 %v485, %v511
        %v519 = vadd.f32 %v486, %v509
        %v520 = vadd.f32 %v487, %v515
        %v521 = vadd.f32 %v488, %v514
        %v522 = vadd.f32 %v489, %v512
        %v523 = vadd.f32 %v490, %v510
        %v524 = vadd.f32 %v491, %v516
        %v525 = vmul.f32 %v517, %v245
        %v526 = vmul.f32 %v521, %v246
        %v527 = vmul.f32 %v518, %v245
        %v528 = vmul.f32 %v522, %v246
        %v529 = vmul.f32 %v519, %v245
        %v530 = vmul.f32 %v523, %v246
        %v531 = vmul.f32 %v525, %v527
        %v532 = vmul.f32 %v526, %v528
        %v533 = vsub.f32 %v529, %v531
        %v534 = vsub.f32 %v530, %v532
        %v535 = vmul.f32 %v520, %v245
        %v536 = vmul.f32 %v524, %v246
        %v537 = vmul.f32 %v525, %v525
        %v538 = vmul.f32 %v526, %v526
        %v539 = vsub.f32 %v535, %v537
        %v540 = vsub.f32 %v536, %v538
        %v541 = vadd.f32 %v539, 1e-08
        %v542 = vadd.f32 %v540, 1e-08
        %v543 = vrcp.pop %v541
        %v544 = vmul.f32 %v533, %v543
        %v545 = vrcp.pop %v542
        %v546 = vmul.f32 %v534, %v545
        %v547 = vmul.f32 %v544, %v525
        %v548 = vmul.f32 %v546, %v526
        %v549 = vsub.f32 %v527, %v547
        %v550 = vsub.f32 %v528, %v548
        %v555 = vrot.slane %v544, 7
        %v556 = vrot.slane %v549, 7
        %v557 = vrot.slane %v546, 7
        %v558 = vsel %vm259, %v555, %v557
        %v559 = vrot.slane %v550, 7
        %v560 = vsel %vm259, %v556, %v559
        %v565 = vsel %vm259, 0.0, %v555
        %v566 = vsel %vm259, 0.0, %v556
        %v567 = vadd.f32 %v544, %v565
        %v568 = vadd.f32 %v549, %v566
        %v569 = vadd.f32 %v546, %v558
        %v570 = vadd.f32 %v550, %v560
        %v571 = vrot.slane %v544, 1
        %v572 = vrot.slane %v546, 1
        %v573 = vsel %vm292, %v571, %v572
        %v574 = vrot.slane %v549, 1
        %v575 = vrot.slane %v550, 1
        %v576 = vsel %vm292, %v574, %v575
        %v581 = vsel %vm292, %v572, 0.0
        %v582 = vsel %vm292, %v575, 0.0
        %v583 = vadd.f32 %v567, %v573
        %v584 = vadd.f32 %v568, %v576
        %v585 = vadd.f32 %v569, %v581
        %v586 = vadd.f32 %v570, %v582
        %v587 = vrot.slane %v544, 6
        %v588 = vrot.slane %v549, 6
        %v589 = vrot.slane %v546, 6
        %v590 = vsel %vm325, %v587, %v589
        %v591 = vrot.slane %v550, 6
        %v592 = vsel %vm325, %v588, %v591
        %v597 = vsel %vm325, 0.0, %v587
        %v598 = vsel %vm325, 0.0, %v588
        %v599 = vadd.f32 %v583, %v597
        %v600 = vadd.f32 %v584, %v598
        %v601 = vadd.f32 %v585, %v590
        %v602 = vadd.f32 %v586, %v592
        %v603 = vrot.slane %v544, 2
        %v604 = vrot.slane %v546, 2
        %v605 = vsel %vm358, %v603, %v604
        %v606 = vrot.slane %v549, 2
        %v607 = vrot.slane %v550, 2
        %v608 = vsel %vm358, %v606, %v607
        %v613 = vsel %vm358, %v604, 0.0
        %v614 = vsel %vm358, %v607, 0.0
        %v615 = vadd.f32 %v599, %v605
        %v616 = vadd.f32 %v600, %v608
        %v617 = vadd.f32 %v601, %v613
        %v618 = vadd.f32 %v602, %v614
        %619 = vrot.lane.b32.xlu0 %v615, 1
        %v620 = vpop.permute.xlu0 %619
        %621 = vrot.lane.b32.xlu0 %v617, 1
        %v622 = vpop.permute.xlu0 %621
        %623 = vrot.lane.b32.xlu0 %v616, 1
        %v624 = vpop.permute.xlu0 %623
        %625 = vrot.lane.b32.xlu0 %v618, 1
        %v626 = vpop.permute.xlu0 %625
        %v627 = vsel %vm409, %v620, %v624
        %v628 = vsel %vm409, %v622, %v626
        %v629 = vsel %vm409, %v624, %v620
        %v630 = vsel %vm409, %v626, %v622
        %v631 = vadd.f32 %v615, %v629
        %v632 = vadd.f32 %v616, %v627
        %v633 = vadd.f32 %v617, %v630
        %v634 = vadd.f32 %v618, %v628
        %635 = vrot.lane.b32.xlu0 %v615, 127
        %v636 = vpop.permute.xlu0 %635
        %637 = vrot.lane.b32.xlu0 %v617, 127
        %v638 = vpop.permute.xlu0 %637
        %639 = vrot.lane.b32.xlu0 %v616, 127
        %v640 = vpop.permute.xlu0 %639
        %641 = vrot.lane.b32.xlu0 %v618, 127
        %v642 = vpop.permute.xlu0 %641
        %v643 = vsel %vm442, %v636, %v640
        %v644 = vsel %vm442, %v638, %v642
        %v645 = vsel %vm442, %v640, %v636
        %v646 = vsel %vm442, %v642, %v638
        %v647 = vadd.f32 %v631, %v643
        %v648 = vadd.f32 %v632, %v645
        %v649 = vadd.f32 %v633, %v644
        %v650 = vadd.f32 %v634, %v646
        %651 = vrot.lane.b32.xlu0 %v615, 2
        %v652 = vpop.permute.xlu0 %651
        %653 = vrot.lane.b32.xlu0 %v617, 2
        %v654 = vpop.permute.xlu0 %653
        %655 = vrot.lane.b32.xlu0 %v616, 2
        %v656 = vpop.permute.xlu0 %655
        %657 = vrot.lane.b32.xlu0 %v618, 2
        %v658 = vpop.permute.xlu0 %657
        %v659 = vsel %vm475, %v652, %v656
        %v660 = vsel %vm475, %v654, %v658
        %v661 = vsel %vm475, %v656, %v652
        %v662 = vsel %vm475, %v658, %v654
        %v663 = vadd.f32 %v647, %v661
        %v664 = vadd.f32 %v648, %v659
        %v665 = vadd.f32 %v649, %v662
        %v666 = vadd.f32 %v650, %v660
        %667 = vrot.lane.b32.xlu0 %v615, 126
        %v668 = vpop.permute.xlu0 %667
        %669 = vrot.lane.b32.xlu0 %v617, 126
        %v670 = vpop.permute.xlu0 %669
        %671 = vrot.lane.b32.xlu0 %v616, 126
        %v672 = vpop.permute.xlu0 %671
        %673 = vrot.lane.b32.xlu0 %v618, 126
        %v674 = vpop.permute.xlu0 %673
        %v675 = vsel %vm508, %v668, %v672
        %v676 = vsel %vm508, %v670, %v674
        %v677 = vsel %vm508, %v672, %v668
        %v678 = vsel %vm508, %v674, %v670
        %v679 = vadd.f32 %v663, %v675
        %v680 = vadd.f32 %v664, %v677
        %v681 = vadd.f32 %v665, %v676
        %v682 = vadd.f32 %v666, %v678
        %v683 = vmul.f32 %v679, %v245
        %v684 = vmul.f32 %v681, %v246
        %v685 = vmul.f32 %v680, %v245
        %v686 = vmul.f32 %v682, %v246
        %v687 = vmul.f32 %v683, %v241
        %v688 = vmul.f32 %v684, %v242
        %v689 = vadd.f32 %v687, %v685
        %v690 = vadd.f32 %v688, %v686
        %691 = vst [vmem:[%s240] sm:$0xff] %v689
        %692 = vst [vmem:[%s240 + $0x8] sm:$0xff] %v690
        %s693 = sand.u32 %s102, 1
        %s694 = scalar_lea.sflag [#allocation4], %s693
        %s695 = sand.u32 %s102, 1
        %s696 = smul.addr %s695, 16
        %s697 = scalar_lea.vmem [#allocation8], %s696
        // Predicated region
        $region45: #{tpu_custom_call.1} parent=31 // pred_check
          %p698 = pneg %p112
        $region46: #{tpu_custom_call.1} parent=31 // pred_check_branch
          %700 = sbr.rel (%p698) target = $region48
        $region47: #{tpu_custom_call.1} parent=31 // pred_region
          %s702 = ssub.s32 256, 256
          %703 = vsyncadd %s694, %s702
          %s704 = smul.addr %s21, 2
          %s705 = smul.addr %s704, 128
          %s706 = scalar_lea.hbm %s3, %s705
          %s707 = sshll.u32 %s697, 4
          %s708 = int_to_ptr.vmem [resolvable:$true] %s707
          %713 = dma.vmem_to_hbm [thread:$0]  %s708, 256, %s706, %s694, 128, 128, 8
        $region48: #{tpu_custom_call.1} parent=31 // pred_fallthru
          _
      $region32: #{tpu_custom_call.1} parent=5 // pred_fallthru
        _
      %p714 = scmp.le.s32.totalorder 2, %s16
      // Predicated region
      $region49: #{tpu_custom_call.1} parent=5 // pred_check
        %p715 = pneg %p714
      $region50: #{tpu_custom_call.1} parent=5 // pred_check_branch
        %717 = sbr.rel (%p715) target = $region52
      $region51: #{tpu_custom_call.1} parent=5 // pred_region
        %s718 = ssub.s32 %s16, 2
        // Predicated region
        $region53: #{tpu_custom_call.1} parent=51 // pred_check
          %p719 = pneg %p118
        $region54: #{tpu_custom_call.1} parent=51 // pred_check_branch
          %721 = sbr.rel (%p719) target = $region56
        $region55: #{tpu_custom_call.1} parent=51 // pred_region
          %s722 = sand.u32 %s103, 1
          %s723 = scalar_lea.sflag [#allocation4], %s722
          %s724 = sand.u32 %s103, 1
          %s725 = smul.addr %s724, 16
          %s726 = scalar_lea.vmem [#allocation8], %s725
          %727 = dma.done %s723, 256
        $region56: #{tpu_custom_call.1} parent=51 // pred_fallthru
          _
      $region52: #{tpu_custom_call.1} parent=5 // pred_fallthru
        _
    $region6: #{tpu_custom_call.1} parent=1 // loop_footer
      %s20 = sadd.s32 1, %s16
    $region7: #{tpu_custom_call.1} parent=1 // loop_footer_branch
      %15 = sbr.rel target = $region3
    $region8: #{tpu_custom_call.1} parent=1 // loop_exit
      _
    %728 = vsyncpa [#allocation3], 1
    %s729 = scalar_lea.sflag [#allocation3], 1
    %730 = vsyncpa %s729, 1
    %731 = vsyncpa [#allocation6], 1
    %s732 = scalar_lea.sflag [#allocation6], 1
    %733 = vsyncpa %s732, 1
    %734 = vsyncpa [#allocation4], 1
    %s735 = scalar_lea.sflag [#allocation4], 1
    %736 = vsyncpa %s735, 1

</llo_original>
